<compile_context>
chip_gen: v6e
topology: v6e:2x2x1
jax: 0.10.0
libtpu: 0.0.40
codegen_flags: <defaults>
</compile_context>

<pallas_src>
import functools

import jax
import jax.numpy as jnp
from jax.experimental import pallas as pl
from jax.experimental.pallas import tpu as pltpu

_LANE = 128
_MAX_TILE_ROWS = 512  # f32: 512*128*4 = 256 KiB per buffer


def _dropout_kernel(seed_ref, x_ref, o_ref, *, threshold, scale, tile_rows):
    """One (tile_rows, 128) tile: counter-based PRNG -> threshold -> scaled select."""
    shape = x_ref.shape

    # Global element index of every lane in this tile (counter for the hash).
    row_in_tile = jax.lax.broadcasted_iota(jnp.uint32, shape, 0)
    col = jax.lax.broadcasted_iota(jnp.uint32, shape, 1)
    row0 = (pl.program_id(0) * tile_rows).astype(jnp.uint32)
    idx = (row0 + row_in_tile) * jnp.uint32(shape[1]) + col

    # 32-bit mix (lowbias32 finalizer) of (index, seed) -> uniform uint32 bits.
    seed = seed_ref[0].astype(jnp.uint32)
    h = idx * jnp.uint32(0x9E3779B1) + seed * jnp.uint32(0x85EBCA77)
    h = h ^ (h >> 16)
    h = h * jnp.uint32(0x7FEB352D)
    h = h ^ (h >> 15)
    h = h * jnp.uint32(0x846CA68B)
    h = h ^ (h >> 16)

    # keep iff uniform > p  <=>  bits >= round(p * 2^32)   (>= so p==0 keeps all)
    keep = h >= jnp.uint32(threshold)

    xv = x_ref[...]
    scaled = (xv.astype(jnp.float32) * jnp.float32(scale)).astype(xv.dtype)
    o_ref[...] = jnp.where(keep, scaled, jnp.zeros_like(scaled))


def _round_up(a, b):
    return ((a + b - 1) // b) * b


def dropout(x, p=0.5, seed=0, training=True):
    """Pallas implementation of the PyTorch Dropout module's forward."""
    if not training or p == 0.0:
        return x
    if p >= 1.0:
        # 1/(1-p) would be inf/nan; standard dropout semantics: drop everything.
        return jnp.zeros_like(x)

    orig_shape = x.shape
    n = x.size

    # Flatten to a lane-dense 2-D slab (rows, 128). Only pad the flat length to
    # a multiple of 128; row raggedness is handled by the grid's last block.
    flat = x.reshape(-1)
    pad = (-n) % _LANE
    if pad:
        flat = jnp.pad(flat, (0, pad))
    rows = flat.shape[0] // _LANE
    x2 = flat.reshape(rows, _LANE)

    # Sublane packing per dtype: 8 (4B), 16 (2B), 32 (1B).
    sub = {4: 8, 2: 16, 1: 32}[jnp.dtype(x.dtype).itemsize]
    tile_rows = min(_MAX_TILE_ROWS, _round_up(rows, sub))
    grid = (pl.cdiv(rows, tile_rows),)

    threshold = min(int(round(p * 2.0**32)), 2**32 - 1)
    scale = 1.0 / (1.0 - p)
    seed_arr = jnp.asarray([seed], dtype=jnp.int32)

    out2 = pl.pallas_call(
        functools.partial(
            _dropout_kernel, threshold=threshold, scale=scale, tile_rows=tile_rows
        ),
        out_shape=jax.ShapeDtypeStruct(x2.shape, x2.dtype),
        grid=grid,
        in_specs=[
            pl.BlockSpec(memory_space=pltpu.MemorySpace.SMEM),      # seed scalar
            pl.BlockSpec((tile_rows, _LANE), lambda i: (i, 0)),     # x tile
        ],
        out_specs=pl.BlockSpec((tile_rows, _LANE), lambda i: (i, 0)),
        compiler_params=pltpu.CompilerParams(
            dimension_semantics=("parallel",),
        ),
    )(seed_arr, x2)

    out_flat = out2.reshape(-1)
    if pad:
        out_flat = out_flat[:n]
    return out_flat.reshape(orig_shape)


if __name__ == "__main__":
    key = jax.random.PRNGKey(0)
    # NCHW input, small shapes: batch=2, channels=4, spatial=16x16
    x = jax.random.normal(key, (2, 4, 16, 16), dtype=jnp.float32)

    p = 0.5
    y = dropout(x, p=p, seed=1234, training=True)
    y = jax.block_until_ready(y)

    # Sanity checks on dropout semantics.
    assert y.shape == x.shape and y.dtype == x.dtype
    kept = y != 0.0
    # Kept elements must equal x / (1 - p) exactly (up to float mul).
    assert jnp.allclose(
        jnp.where(kept, y, 0.0),
        jnp.where(kept, x / (1.0 - p), 0.0),
        rtol=1e-6,
        atol=1e-6,
    )
    # Roughly half of elements should be dropped for p=0.5.
    keep_frac = jnp.mean(kept.astype(jnp.float32))
    assert 0.3 < float(keep_frac) < 0.7, f"keep fraction {keep_frac} looks wrong"

    # Eval mode: identity.
    y_eval = jax.block_until_ready(dropout(x, p=p, training=False))
    assert jnp.array_equal(y_eval, x)

    # p=0: identity in training mode too.
    y_p0 = jax.block_until_ready(dropout(x, p=0.0, seed=7, training=True))
    assert jnp.array_equal(y_p0, x)

    print("KERNEL_OK")
</pallas_src>

<mosaic_0001>
module attributes {stable_mosaic.version = 11 : i64} {
  func.func @_dropout_kernel(%arg0: i32, %arg1: memref<1xi32, #tpu.memory_space<smem>>, %arg2: memref<16x128xf32, #tpu.memory_space<vmem>>, %arg3: memref<16x128xf32, #tpu.memory_space<vmem>>) attributes {dimension_semantics = [#tpu.dimension_semantics<parallel>], iteration_bounds = array<i64: 1>, scalar_prefetch = 0 : i64, scratch_operands = 0 : i64, tpu.core_type = #tpu.core_type<tc>, window_params = [{transform_indices = @transform_0, window_bounds = array<i64: 1>}, {transform_indices = @transform_1, window_bounds = array<i64: 16, 128>}, {transform_indices = @transform_2, window_bounds = array<i64: 16, 128>}]} {
    %0 = tpu.iota {dimensions = array<i32: 0>} : vector<16x128xi32>
    %1 = tpu.iota {dimensions = array<i32: 1>} : vector<16x128xi32>
    %c16_i32 = arith.constant 16 : i32
    %2 = arith.muli %arg0, %c16_i32 : i32
    %3 = vector.broadcast %2 : i32 to vector<16x128xi32>
    %4 = arith.addi %3, %0 : vector<16x128xi32>
    %c128_i32 = arith.constant 128 : i32
    %5 = vector.broadcast %c128_i32 : i32 to vector<16x128xi32>
    %6 = arith.muli %4, %5 : vector<16x128xi32>
    %7 = arith.addi %6, %1 : vector<16x128xi32>
    %c0 = arith.constant 0 : index
    %8 = memref.load %arg1[%c0] : memref<1xi32, #tpu.memory_space<smem>>
    %c-1640531535_i32 = arith.constant -1640531535 : i32
    %9 = vector.broadcast %c-1640531535_i32 : i32 to vector<16x128xi32>
    %10 = arith.muli %7, %9 : vector<16x128xi32>
    %c-2048144777_i32 = arith.constant -2048144777 : i32
    %11 = arith.muli %8, %c-2048144777_i32 : i32
    %12 = vector.broadcast %11 : i32 to vector<16x128xi32>
    %13 = arith.addi %10, %12 : vector<16x128xi32>
    %c16_i32_0 = arith.constant 16 : i32
    %14 = vector.broadcast %c16_i32_0 : i32 to vector<16x128xi32>
    %15 = arith.shrui %13, %14 : vector<16x128xi32>
    %16 = arith.xori %13, %15 : vector<16x128xi32>
    %c2146121005_i32 = arith.constant 2146121005 : i32
    %17 = vector.broadcast %c2146121005_i32 : i32 to vector<16x128xi32>
    %18 = arith.muli %16, %17 : vector<16x128xi32>
    %c15_i32 = arith.constant 15 : i32
    %19 = vector.broadcast %c15_i32 : i32 to vector<16x128xi32>
    %20 = arith.shrui %18, %19 : vector<16x128xi32>
    %21 = arith.xori %18, %20 : vector<16x128xi32>
    %c-2073254261_i32 = arith.constant -2073254261 : i32
    %22 = vector.broadcast %c-2073254261_i32 : i32 to vector<16x128xi32>
    %23 = arith.muli %21, %22 : vector<16x128xi32>
    %c16_i32_1 = arith.constant 16 : i32
    %24 = vector.broadcast %c16_i32_1 : i32 to vector<16x128xi32>
    %25 = arith.shrui %23, %24 : vector<16x128xi32>
    %26 = arith.xori %23, %25 : vector<16x128xi32>
    %c-2147483648_i32 = arith.constant -2147483648 : i32
    %27 = vector.broadcast %c-2147483648_i32 : i32 to vector<16x128xi32>
    %28 = arith.cmpi uge, %26, %27 : vector<16x128xi32>
    %c0_2 = arith.constant 0 : index
    %c0_3 = arith.constant 0 : index
    %29 = vector.load %arg2[%c0_2, %c0_3] : memref<16x128xf32, #tpu.memory_space<vmem>>, vector<16x128xf32>
    %cst = arith.constant 2.000000e+00 : f32
    %30 = vector.broadcast %cst : f32 to vector<16x128xf32>
    %31 = arith.mulf %29, %30 : vector<16x128xf32>
    %cst_4 = arith.constant 0.000000e+00 : f32
    %32 = vector.broadcast %cst_4 : f32 to vector<16x128xf32>
    %33 = arith.select %28, %31, %32 : vector<16x128xi1>, vector<16x128xf32>
    %c0_5 = arith.constant 0 : index
    %c0_6 = arith.constant 0 : index
    %34 = vector.load %arg3[%c0_5, %c0_6] : memref<16x128xf32, #tpu.memory_space<vmem>>, vector<16x128xf32>
    tpu.vector_store %arg3[%c0_5, %c0_6], %33 {strides = array<i32>} : memref<16x128xf32, #tpu.memory_space<vmem>>, vector<16x128xf32>,
    return
  }
  func.func @transform_0(%arg0: i32) -> i32 {
    %c0_i32 = arith.constant 0 : i32
    %c0_i32_0 = arith.constant 0 : i32
    return %c0_i32 : i32
  }
  func.func @transform_1(%arg0: i32) -> (i32, i32) {
    %c0_i32 = arith.constant 0 : i32
    %c0_i32_0 = arith.constant 0 : i32
    return %arg0, %c0_i32 : i32, i32
  }
  func.func @transform_2(%arg0: i32) -> (i32, i32) {
    %c0_i32 = arith.constant 0 : i32
    %c0_i32_0 = arith.constant 0 : i32
    return %arg0, %c0_i32 : i32, i32
  }
}

</mosaic_0001>

<llo_original>
// kernel: tpu_custom_call.1
$region0: #{tpu_custom_call.1}
  #allocation0 [shape = 'u32[]', space=smem, size = 0x4, offset = 0x4, fixed_abs, tag = 'smem constant byte address 0x4 - core index']
  #allocation1 [shape = 'u32[144,128]{1,0:T(1,128)}', space=vmem, size = 0x12000, scoped, tag = 'internal scratch']
  #allocation2 [shape = 's32[1]{0:T(128)S(6)}', space=smem, size = 0x200, scoped, tag = 'scoped memory for tpu_custom_call.1']
  %s0 = inlined_call_operand.<no memory space> [shape: s32[1], index: 0, kind: input, shape index: {}]
  %s1 = inlined_call_operand.hbm [shape: f32[16,128], index: 1, kind: input, shape index: {}]
  %s2 = inlined_call_operand.hbm [shape: f32[16,128], index: 2, kind: output, shape index: {}]
  %s3 = sld [smem:[#allocation0]]
  $region22: #{tpu_custom_call.1} parent=0
    _
  %s5 = ssub.s32 1, %s3
  %s6 = scalar_select 0, %s5, %s3
  %7 = sst [smem:[#allocation2]] %s0
  $region1: #{tpu_custom_call.1} parent=0
    #allocation3 [shape = 'u8[8192]{0}', space=vmem, size = 0x2000, scoped, tag = 'input window, operand 1, single buffered']
    #allocation4 [shape = 's32[1]{0}', space=sflag, size = 0x4, scoped, tag = 'scoped memory for tpu_custom_call.1']
    #allocation5 [shape = 's32[1]{0}', space=sflag, size = 0x4, scoped, tag = 'scoped memory for tpu_custom_call.1']
    #allocation6 [shape = 'u8[8192]{0}', space=vmem, size = 0x2000, scoped, tag = 'output window, operand 0, single buffered']
    %8 = vsyncpa [#allocation4], 0
    %9 = vsyncpa [#allocation5], 0
    // Predicated region
    $region2: #{tpu_custom_call.1} parent=1 // pred_check
      _
    $region3: #{tpu_custom_call.1} parent=1 // pred_check_branch
      %11 = sbr.rel (0) target = $region5
    $region4: #{tpu_custom_call.1} parent=1 // pred_region
      _
    $region5: #{tpu_custom_call.1} parent=1 // pred_fallthru
      _
    // Predicated region
    $region6: #{tpu_custom_call.1} parent=1 // pred_check
      _
    $region7: #{tpu_custom_call.1} parent=1 // pred_check_branch
      %13 = sbr.rel (0) target = $region9
    $region8: #{tpu_custom_call.1} parent=1 // pred_region
      %s15 = ssub.s32 256, 256
      %16 = vsyncadd [#allocation4], %s15
      %s17 = sshll.u32 [#allocation3], 4
      %s18 = int_to_ptr.vmem [resolvable:$true] %s17
      %23 = dma.hbm_to_vmem [thread:$0]  %s1, 256, %s18, [#allocation4], 128, 128, 8
    $region9: #{tpu_custom_call.1} parent=1 // pred_fallthru
      _
    // Predicated region
    $region10: #{tpu_custom_call.1} parent=1 // pred_check
      _
    $region11: #{tpu_custom_call.1} parent=1 // pred_check_branch
      %25 = sbr.rel (0) target = $region13
    $region12: #{tpu_custom_call.1} parent=1 // pred_region
      %26 = dma.done [#allocation4], 256
    $region13: #{tpu_custom_call.1} parent=1 // pred_fallthru
      _
    %v27 = vlaneseq
    %v28 = vshrl.u32 %v27, 7
    %v29 = vadd.s32 %v28, 8
    %v30 = vlaneseq
    %v31 = vand.u32 %v30, 127
    %s32 = smul.u32 0, 16
    %v33 = vstv %s32
    %v34 = vadd.s32 %v33, %v28
    %v35 = vadd.s32 %v33, %v29
    %v36 = vmul.u32 %v34, 128
    %v37 = vmul.u32 %v35, 128
    %v38 = vadd.s32 %v36, %v31
    %v39 = vadd.s32 %v37, %v31
    %s40 = sld [smem:[#allocation2]]
    %v41 = vmul.u32 %v38, 2654435761
    %v42 = vmul.u32 %v39, 2654435761
    %s43 = smul.u32 %s40, 2246822519
    %v44 = vstv %s43
    %v45 = vadd.s32 %v41, %v44
    %v46 = vadd.s32 %v42, %v44
    %v47 = vshrl.u32 %v45, 16
    %v48 = vshrl.u32 %v46, 16
    %v49 = vxor.u32 %v45, %v47
    %v50 = vxor.u32 %v46, %v48
    %v51 = vmul.u32 %v49, 2146121005
    %v52 = vmul.u32 %v50, 2146121005
    %v53 = vshrl.u32 %v51, 15
    %v54 = vshrl.u32 %v52, 15
    %v55 = vxor.u32 %v51, %v53
    %v56 = vxor.u32 %v52, %v54
    %v57 = vmul.u32 %v55, 2221713035
    %v58 = vmul.u32 %v56, 2221713035
    %v59 = vshrl.u32 %v57, 16
    %v60 = vshrl.u32 %v58, 16
    %v61 = vxor.u32 %v57, %v59
    %v62 = vxor.u32 %v58, %v60
    %vm63 = vcmp.ge.u32.totalorder %v61, 2147483648
    %vm64 = vcmp.ge.u32.totalorder %v62, 2147483648
    %v65 = vld [vmem:[#allocation3] sm:$0xff]
    %v66 = vld [vmem:[#allocation3 + $0x8] sm:$0xff]
    %v67 = vmul.f32 %v65, 2.0
    %v68 = vmul.f32 %v66, 2.0
    %v69 = vsel %vm63, %v67, 0.0
    %v70 = vsel %vm64, %v68, 0.0
    %71 = vst [vmem:[#allocation6] sm:$0xff] %v69
    %72 = vst [vmem:[#allocation6 + $0x8] sm:$0xff] %v70
    // Predicated region
    $region14: #{tpu_custom_call.1} parent=1 // pred_check
      _
    $region15: #{tpu_custom_call.1} parent=1 // pred_check_branch
      %74 = sbr.rel (0) target = $region17
    $region16: #{tpu_custom_call.1} parent=1 // pred_region
      %s76 = ssub.s32 256, 256
      %77 = vsyncadd [#allocation5], %s76
      %s78 = sshll.u32 [#allocation6], 4
      %s79 = int_to_ptr.vmem [resolvable:$true] %s78
      %84 = dma.vmem_to_hbm [thread:$0]  %s79, 256, %s2, [#allocation5], 128, 128, 8
    $region17: #{tpu_custom_call.1} parent=1 // pred_fallthru
      _
    // Predicated region
    $region18: #{tpu_custom_call.1} parent=1 // pred_check
      _
    $region19: #{tpu_custom_call.1} parent=1 // pred_check_branch
      %86 = sbr.rel (0) target = $region21
    $region20: #{tpu_custom_call.1} parent=1 // pred_region
      %87 = dma.done [#allocation5], 256
    $region21: #{tpu_custom_call.1} parent=1 // pred_fallthru
      _
    %88 = vsyncpa [#allocation4], 1
    %89 = vsyncpa [#allocation5], 1

</llo_original>
